<compile_context>
chip_gen: v7x
topology: tpu7x:2x2x1
jax: 0.10.0
libtpu: 0.0.40
codegen_flags: <defaults>
</compile_context>

<pallas_src>
import jax
import jax.numpy as jnp
import numpy as np
from jax.experimental import pallas as pl
from jax.experimental.pallas import tpu as pltpu


def _drop_path_kernel(x_ref, scale_ref, o_ref):
    # scale_ref: (Bt, 1) per-sample scale, broadcast across the lane-dense
    # feature tile.  Single VPU multiply per vreg; no dtype promotion.
    o_ref[...] = x_ref[...] * scale_ref[...]


def drop_path(x, drop_prob, key, training=True):
    """Pallas DropPath forward.  x: (B, ...) -- any trailing shape."""
    if drop_prob == 0.0 or not training:
        return x
    keep_prob = 1.0 - float(drop_prob)

    orig_shape = x.shape
    B = int(orig_shape[0])
    F = 1
    for d in orig_shape[1:]:
        F *= int(d)

    # Per-sample binary mask scaled by 1/keep_prob, computed ONCE outside the
    # kernel hot loop (matches torch.rand + floor + div in the reference).
    u = jax.random.uniform(key, (B, 1), dtype=jnp.float32)
    scale = (jnp.floor(keep_prob + u) * (1.0 / keep_prob)).astype(x.dtype)

    # Lane-dense flattened layout: (B, F) with F padded to a multiple of 128
    # only if needed (pad is sliced back off below).
    x2 = x.reshape(B, F)
    Fp = ((F + 127) // 128) * 128
    if Fp != F:
        x2 = jnp.pad(x2, ((0, 0), (0, Fp - F)))

    itemsize = jnp.dtype(x.dtype).itemsize
    # Batch tile: full batch if small, else a sublane multiple of 8.
    Bt = B if B < 8 else 8
    # Feature tile: multiple of 128 lanes, block capped at ~4 MiB so the
    # double-buffered in+out footprint fits every generation's VMEM (v7x: 64 MiB).
    max_block_bytes = 4 * 1024 * 1024
    ft_cap = max(128, (max_block_bytes // (Bt * itemsize)) // 128 * 128)
    Ft = min(Fp, ft_cap)

    grid = (pl.cdiv(B, Bt), pl.cdiv(Fp, Ft))

    cost = pl.CostEstimate(
        flops=B * Fp,
        transcendentals=0,
        bytes_accessed=2 * B * Fp * itemsize + B * itemsize,
    )

    out = pl.pallas_call(
        _drop_path_kernel,
        out_shape=jax.ShapeDtypeStruct((B, Fp), x.dtype),
        grid_spec=pltpu.PrefetchScalarGridSpec(
            num_scalar_prefetch=0,
            grid=grid,
            in_specs=[
                pl.BlockSpec((Bt, Ft), lambda i, j: (i, j)),
                pl.BlockSpec((Bt, 1), lambda i, j: (i, 0)),
            ],
            out_specs=pl.BlockSpec((Bt, Ft), lambda i, j: (i, j)),
        ),
        compiler_params=pltpu.CompilerParams(
            dimension_semantics=("parallel", "parallel")),
        cost_estimate=cost,
    )(x2, scale)

    if Fp != F:
        out = out[:, :F]
    return out.reshape(orig_shape)


if __name__ == "__main__":
    key = jax.random.PRNGKey(0)
    x_key, mask_key = jax.random.split(key)

    B, N, C = 2, 8, 32                       # ViT token layout (batch, tokens, channels)
    x = jax.random.normal(x_key, (B, N, C), dtype=jnp.float32)
    drop_prob = 0.3
    keep_prob = 1.0 - drop_prob

    # Training path (the Pallas kernel).
    out = drop_path(x, drop_prob=drop_prob, key=mask_key, training=True)
    out = jax.block_until_ready(out)

    # Eval / drop_prob==0 paths are identity (module semantics).
    out_eval = drop_path(x, drop_prob=drop_prob, key=mask_key, training=False)
    assert out_eval.shape == x.shape and bool(jnp.all(out_eval == x))

    # Sanity: each sample is either zeroed or scaled by exactly 1/keep_prob.
    out_np, x_np = np.asarray(out), np.asarray(x)
    for b in range(B):
        zeroed = np.allclose(out_np[b], 0.0, atol=1e-6)
        scaled = np.allclose(out_np[b], x_np[b] / keep_prob, rtol=1e-5, atol=1e-5)
        assert zeroed or scaled, "DropPath output is not a valid per-sample mask"

    print("KERNEL_OK")
</pallas_src>

<mosaic_0001>
module attributes {stable_mosaic.version = 11 : i64} {
  func.func @_drop_path_kernel(%arg0: i32, %arg1: i32, %arg2: memref<2x256xf32, #tpu.memory_space<vmem>>, %arg3: memref<2x1xf32, #tpu.memory_space<vmem>>, %arg4: memref<2x256xf32, #tpu.memory_space<vmem>>) attributes {dimension_semantics = [#tpu.dimension_semantics<parallel>, #tpu.dimension_semantics<parallel>], iteration_bounds = array<i64: 1, 1>, scalar_prefetch = 0 : i64, scratch_operands = 0 : i64, tpu.core_type = #tpu.core_type<tc>, window_params = [{transform_indices = @transform_0, window_bounds = array<i64: 2, 256>}, {transform_indices = @transform_1, window_bounds = array<i64: 2, 1>}, {transform_indices = @transform_2, window_bounds = array<i64: 2, 256>}]} {
    %c0 = arith.constant 0 : index
    %c0_0 = arith.constant 0 : index
    %0 = vector.load %arg2[%c0, %c0_0] : memref<2x256xf32, #tpu.memory_space<vmem>>, vector<2x256xf32>
    %c0_1 = arith.constant 0 : index
    %c0_2 = arith.constant 0 : index
    %1 = vector.load %arg3[%c0_1, %c0_2] : memref<2x1xf32, #tpu.memory_space<vmem>>, vector<2x1xf32>
    %2 = vector.broadcast %1 : vector<2x1xf32> to vector<2x256xf32>
    %3 = arith.mulf %0, %2 : vector<2x256xf32>
    %c0_3 = arith.constant 0 : index
    %c0_4 = arith.constant 0 : index
    %4 = vector.load %arg4[%c0_3, %c0_4] : memref<2x256xf32, #tpu.memory_space<vmem>>, vector<2x256xf32>
    tpu.vector_store %arg4[%c0_3, %c0_4], %3 {strides = array<i32>} : memref<2x256xf32, #tpu.memory_space<vmem>>, vector<2x256xf32>,
    return
  }
  func.func @transform_0(%arg0: i32, %arg1: i32) -> (i32, i32) {
    %c0_i32 = arith.constant 0 : i32
    return %arg0, %arg1 : i32, i32
  }
  func.func @transform_1(%arg0: i32, %arg1: i32) -> (i32, i32) {
    %c0_i32 = arith.constant 0 : i32
    %c0_i32_0 = arith.constant 0 : i32
    return %arg0, %c0_i32 : i32, i32
  }
  func.func @transform_2(%arg0: i32, %arg1: i32) -> (i32, i32) {
    %c0_i32 = arith.constant 0 : i32
    return %arg0, %arg1 : i32, i32
  }
}

</mosaic_0001>

<llo_original>
// kernel: tpu_custom_call.1
$region0: #{tpu_custom_call.1}
  #allocation0 [shape = 'u32[]', space=smem, size = 0x4, offset = 0x4, fixed_abs, tag = 'smem constant byte address 0x4 - core index']
  #allocation1 [shape = 'u32[144,128]{1,0:T(1,128)}', space=vmem, size = 0x12000, scoped, tag = 'internal scratch']
  %s0 = inlined_call_operand.hbm [shape: f32[2,256], index: 0, kind: input, shape index: {}]
  %s1 = inlined_call_operand.vmem [shape: f32[2,1], index: 1, kind: input, shape index: {}]
  %s2 = inlined_call_operand.hbm [shape: f32[2,256], index: 2, kind: output, shape index: {}]
  %s3 = sld [smem:[#allocation0]]
  $region22: #{tpu_custom_call.1} parent=0
    _
  %s5 = ssub.s32 1, %s3
  %s6 = scalar_select 0, %s5, %s3
  $region1: #{tpu_custom_call.1} parent=0
    #allocation2 [shape = 'u8[2048]{0}', space=vmem, size = 0x800, scoped, tag = 'input window, operand 0, single buffered']
    #allocation3 [shape = 's32[1]{0}', space=sflag, size = 0x4, scoped, tag = 'scoped memory for tpu_custom_call.1']
    #allocation4 [shape = 's32[1]{0}', space=sflag, size = 0x4, scoped, tag = 'scoped memory for tpu_custom_call.1']
    #allocation5 [shape = 'u8[2048]{0}', space=vmem, size = 0x800, scoped, tag = 'output window, operand 0, single buffered']
    %7 = vsyncpa [#allocation3], 0
    %8 = vsyncpa [#allocation4], 0
    // Predicated region
    $region2: #{tpu_custom_call.1} parent=1 // pred_check
      _
    $region3: #{tpu_custom_call.1} parent=1 // pred_check_branch
      %10 = sbr.rel (0) target = $region5
    $region4: #{tpu_custom_call.1} parent=1 // pred_region
      %s12 = ssub.s32 64, 64
      %13 = vsyncadd [#allocation3], %s12
      %s15 = sshll.u32 [#allocation2], 4
      %s16 = int_to_ptr.vmem [resolvable:$true] %s15
      %18 = dma.hbm_to_vmem [thread:$0]  %s0, 64, %s16, [#allocation3]
    $region5: #{tpu_custom_call.1} parent=1 // pred_fallthru
      _
    // Predicated region
    $region6: #{tpu_custom_call.1} parent=1 // pred_check
      _
    $region7: #{tpu_custom_call.1} parent=1 // pred_check_branch
      %20 = sbr.rel (0) target = $region9
    $region8: #{tpu_custom_call.1} parent=1 // pred_region
      _
    $region9: #{tpu_custom_call.1} parent=1 // pred_fallthru
      _
    // Predicated region
    $region10: #{tpu_custom_call.1} parent=1 // pred_check
      _
    $region11: #{tpu_custom_call.1} parent=1 // pred_check_branch
      %22 = sbr.rel (0) target = $region13
    $region12: #{tpu_custom_call.1} parent=1 // pred_region
      %23 = dma.done [#allocation3], 64
    $region13: #{tpu_custom_call.1} parent=1 // pred_fallthru
      _
    %v24 = vld [vmem:[#allocation2] sm:$0xf]
    %v25 = vld [vmem:[%s1] sm:$0x3]
    %27 = vset.pattern.permute.xlu0 0
    %28 = vperm.xlu0 %27, %v25
    %v29 = vpop.permute.xlu0 %28
    %v31 = vunpack.c.l.s4 269488144
    %v32 = vunpack.c.0.s8 %v31
    %v33 = vlaneseq
    %v34 = vshrl.u32 %v33, 7
    %v35 = vsub.s32 %v32, %v34
    %v36 = vrot.slane %v29, %v35
    %v38 = vmul.f32 %v24, %v36
    %39 = vst [vmem:[#allocation5] sm:$0xf] %v38
    // Predicated region
    $region14: #{tpu_custom_call.1} parent=1 // pred_check
      _
    $region15: #{tpu_custom_call.1} parent=1 // pred_check_branch
      %41 = sbr.rel (0) target = $region17
    $region16: #{tpu_custom_call.1} parent=1 // pred_region
      %s43 = ssub.s32 64, 64
      %44 = vsyncadd [#allocation4], %s43
      %s46 = sshll.u32 [#allocation5], 4
      %s47 = int_to_ptr.vmem [resolvable:$true] %s46
      %49 = dma.vmem_to_hbm [thread:$0]  %s47, 64, %s2, [#allocation4]
    $region17: #{tpu_custom_call.1} parent=1 // pred_fallthru
      _
    // Predicated region
    $region18: #{tpu_custom_call.1} parent=1 // pred_check
      _
    $region19: #{tpu_custom_call.1} parent=1 // pred_check_branch
      %51 = sbr.rel (0) target = $region21
    $region20: #{tpu_custom_call.1} parent=1 // pred_region
      %52 = dma.done [#allocation4], 64
    $region21: #{tpu_custom_call.1} parent=1 // pred_fallthru
      _
    %53 = vsyncpa [#allocation3], 1
    %54 = vsyncpa [#allocation4], 1

</llo_original>
